<compile_context>
chip_gen: v5e
topology: v5e:2x2
jax: 0.10.0
libtpu: 0.0.40
codegen_flags: <defaults>
</compile_context>

<pallas_src>
import functools
import math

import jax
import jax.numpy as jnp
from jax.experimental import pallas as pl
from jax.experimental.pallas import tpu as pltpu


def _round_up(n: int, m: int) -> int:
    return ((n + m - 1) // m) * m


def _sinusoidal_pos_emb_kernel(x_ref, sel_ref, mask_ref, out_ref, *, group):
    """One row-tile of the embedding, lane-dense layout.

    x_ref:    (tile_r, group)  f32  -- `group` logical timesteps per output row
    sel_ref:  (group, lanes)   f32  -- block-diagonal frequency selector
    mask_ref: (1, lanes)       f32  -- 1.0 where the lane is a sin lane, 0.0 for cos
    out_ref:  (tile_r, lanes)  out dtype
    """
    x = x_ref[...]
    sel = sel_ref[...]
    # arg[r, l] = x[r, l // dim] * freqs_full[l % dim], assembled as a sum of
    # `group` exact f32 broadcast multiplies (sel rows are zero outside their
    # own dim-wide lane chunk). No lane-axis concat, no relayout.
    arg = x[:, 0:1] * sel[0:1, :]
    for g in range(1, group):
        arg = arg + x[:, g:g + 1] * sel[g:g + 1, :]

    s = jnp.sin(arg)
    c = jnp.cos(arg)
    # Per-lane select replaces torch.cat((sin, cos), dim=-1): one contiguous
    # lane-dense store, VPU select only.
    out_ref[...] = jnp.where(mask_ref[...] > 0.5, s, c).astype(out_ref.dtype)


def sinusoidal_pos_emb(x: jax.Array, dim: int, *, tile_rows: int = 1024,
                       out_dtype=jnp.float32) -> jax.Array:
    """Pallas implementation of SinusoidalPosEmb.forward.

    x: (B,) array of (time) positions.  Returns (B, dim) = [sin(x*f) | cos(x*f)].
    """
    assert dim % 2 == 0 and dim >= 4, "dim must be even and >= 4 (half_dim-1 > 0)"
    half_dim = dim // 2
    b = x.shape[0]
    x = x.astype(jnp.float32)

    # Lane-dense packing: put `group` logical rows into each 128-lane output row
    # so the store is a full-width vst (dim < 128 case). Falls back to group=1
    # (plain (rows, dim) layout) for dim >= 128 or awkward dims.
    if dim < 128 and 128 % dim == 0:
        group = 128 // dim
    else:
        group = 1
    lanes = group * dim

    # Constant tables, computed once in plain JAX (hoisted out of the kernel).
    scale = math.log(10000.0) / (half_dim - 1)
    freqs = jnp.exp(jnp.arange(half_dim, dtype=jnp.float32) * -scale)       # (half_dim,)
    freqs_full = jnp.tile(freqs, 2)                                         # (dim,)
    sel = jnp.kron(jnp.eye(group, dtype=jnp.float32),
                   freqs_full[None, :])                                     # (group, lanes)
    sin_mask = ((jnp.arange(lanes) % dim) < half_dim
                ).astype(jnp.float32)[None, :]                              # (1, lanes)

    # Group + pad the batch so the row axis tiles in multiples of 8.
    rows = -(-b // group)
    tile_r = min(tile_rows, _round_up(rows, 8))        # multiple of 8
    rows_padded = _round_up(rows, tile_r)
    x_grouped = jnp.pad(x, (0, rows_padded * group - b)).reshape(rows_padded, group)

    # Per-block VMEM: (tile_r * lanes * 4B) = 512 KiB at tile_r=1024 (~1 MiB
    # double-buffered) -- well under the scoped VMEM limit on v5e/v6e/v7x.
    grid = (rows_padded // tile_r,)
    out = pl.pallas_call(
        functools.partial(_sinusoidal_pos_emb_kernel, group=group),
        out_shape=jax.ShapeDtypeStruct((rows_padded, lanes), out_dtype),
        grid_spec=pltpu.PrefetchScalarGridSpec(
            num_scalar_prefetch=0,
            grid=grid,
            in_specs=[
                pl.BlockSpec((tile_r, group), lambda i: (i, 0)),
                pl.BlockSpec((group, lanes), lambda i: (0, 0)),
                pl.BlockSpec((1, lanes), lambda i: (0, 0)),
            ],
            out_specs=pl.BlockSpec((tile_r, lanes), lambda i: (i, 0)),
        ),
        compiler_params=pltpu.CompilerParams(
            dimension_semantics=("parallel",)),
    )(x_grouped, sel, sin_mask)

    # Undo the lane-dense grouping (contiguous reshape, free in XLA), drop padding.
    return out.reshape(rows_padded * group, dim)[:b]


def _reference(x, dim):
    half_dim = dim // 2
    emb = math.log(10000.0) / (half_dim - 1)
    emb = jnp.exp(jnp.arange(half_dim, dtype=jnp.float32) * -emb)
    emb = x[:, None].astype(jnp.float32) * emb[None, :]
    return jnp.concatenate([jnp.sin(emb), jnp.cos(emb)], axis=-1)


if __name__ == "__main__":
    key = jax.random.PRNGKey(0)
    # Small cases exercising: grouped lane-dense path (dim=32), a batch that is
    # not a multiple of the group, and the plain path (dim=128).
    cases = [(8, 32), (6, 32), (10, 128)]
    for i, (batch, dim) in enumerate(cases):
        k = jax.random.fold_in(key, i)
        x = jax.random.uniform(k, (batch,), dtype=jnp.float32) * 1000.0

        out = jax.block_until_ready(sinusoidal_pos_emb(x, dim))
        ref = _reference(x, dim)

        assert out.shape == (batch, dim), (out.shape, batch, dim)
        assert jnp.allclose(out, ref, atol=1e-5, rtol=1e-5), \
            f"mismatch vs reference for batch={batch}, dim={dim}"

    print("KERNEL_OK")
</pallas_src>

<mosaic_0001>
module attributes {stable_mosaic.version = 11 : i64} {
  func.func @_sinusoidal_pos_emb_kernel(%arg0: i32, %arg1: memref<8x4xf32, #tpu.memory_space<vmem>>, %arg2: memref<4x128xf32, #tpu.memory_space<vmem>>, %arg3: memref<1x128xf32, #tpu.memory_space<vmem>>, %arg4: memref<8x128xf32, #tpu.memory_space<vmem>>) attributes {dimension_semantics = [#tpu.dimension_semantics<parallel>], iteration_bounds = array<i64: 1>, scalar_prefetch = 0 : i64, scratch_operands = 0 : i64, tpu.core_type = #tpu.core_type<tc>, window_params = [{transform_indices = @transform_0, window_bounds = array<i64: 8, 4>}, {pipeline_mode = #tpu.pipeline_mode<synchronous>, transform_indices = @transform_1, window_bounds = array<i64: 4, 128>}, {pipeline_mode = #tpu.pipeline_mode<synchronous>, transform_indices = @transform_2, window_bounds = array<i64: 1, 128>}, {transform_indices = @transform_3, window_bounds = array<i64: 8, 128>}]} {
    %c0 = arith.constant 0 : index
    %c0_0 = arith.constant 0 : index
    %0 = vector.load %arg1[%c0, %c0_0] : memref<8x4xf32, #tpu.memory_space<vmem>>, vector<8x4xf32>
    %c0_1 = arith.constant 0 : index
    %c0_2 = arith.constant 0 : index
    %1 = vector.load %arg2[%c0_1, %c0_2] : memref<4x128xf32, #tpu.memory_space<vmem>>, vector<4x128xf32>
    %2 = vector.extract_strided_slice %0 {offsets = [0, 0], sizes = [8, 1], strides = [1, 1]} : vector<8x4xf32> to vector<8x1xf32>
    %3 = vector.extract_strided_slice %1 {offsets = [0, 0], sizes = [1, 128], strides = [1, 1]} : vector<4x128xf32> to vector<1x128xf32>
    %4 = vector.broadcast %2 : vector<8x1xf32> to vector<8x128xf32>
    %5 = vector.broadcast %3 : vector<1x128xf32> to vector<8x128xf32>
    %6 = arith.mulf %4, %5 : vector<8x128xf32>
    %7 = vector.extract_strided_slice %0 {offsets = [0, 1], sizes = [8, 1], strides = [1, 1]} : vector<8x4xf32> to vector<8x1xf32>
    %8 = vector.extract_strided_slice %1 {offsets = [1, 0], sizes = [1, 128], strides = [1, 1]} : vector<4x128xf32> to vector<1x128xf32>
    %9 = vector.broadcast %7 : vector<8x1xf32> to vector<8x128xf32>
    %10 = vector.broadcast %8 : vector<1x128xf32> to vector<8x128xf32>
    %11 = arith.mulf %9, %10 : vector<8x128xf32>
    %12 = arith.addf %6, %11 : vector<8x128xf32>
    %13 = vector.extract_strided_slice %0 {offsets = [0, 2], sizes = [8, 1], strides = [1, 1]} : vector<8x4xf32> to vector<8x1xf32>
    %14 = vector.extract_strided_slice %1 {offsets = [2, 0], sizes = [1, 128], strides = [1, 1]} : vector<4x128xf32> to vector<1x128xf32>
    %15 = vector.broadcast %13 : vector<8x1xf32> to vector<8x128xf32>
    %16 = vector.broadcast %14 : vector<1x128xf32> to vector<8x128xf32>
    %17 = arith.mulf %15, %16 : vector<8x128xf32>
    %18 = arith.addf %12, %17 : vector<8x128xf32>
    %19 = vector.extract_strided_slice %0 {offsets = [0, 3], sizes = [8, 1], strides = [1, 1]} : vector<8x4xf32> to vector<8x1xf32>
    %20 = vector.extract_strided_slice %1 {offsets = [3, 0], sizes = [1, 128], strides = [1, 1]} : vector<4x128xf32> to vector<1x128xf32>
    %21 = vector.broadcast %19 : vector<8x1xf32> to vector<8x128xf32>
    %22 = vector.broadcast %20 : vector<1x128xf32> to vector<8x128xf32>
    %23 = arith.mulf %21, %22 : vector<8x128xf32>
    %24 = arith.addf %18, %23 : vector<8x128xf32>
    %25 = math.sin %24 : vector<8x128xf32>
    %26 = math.cos %24 : vector<8x128xf32>
    %c0_3 = arith.constant 0 : index
    %c0_4 = arith.constant 0 : index
    %27 = vector.load %arg3[%c0_3, %c0_4] : memref<1x128xf32, #tpu.memory_space<vmem>>, vector<1x128xf32>
    %cst = arith.constant 5.000000e-01 : f32
    %28 = vector.broadcast %cst : f32 to vector<1x128xf32>
    %29 = arith.cmpf ogt, %27, %28 : vector<1x128xf32>
    %30 = vector.shape_cast %29 : vector<1x128xi1> to vector<1x128xi1>
    %31 = vector.broadcast %30 : vector<1x128xi1> to vector<8x128xi1>
    %32 = arith.select %31, %25, %26 : vector<8x128xi1>, vector<8x128xf32>
    %c0_5 = arith.constant 0 : index
    %c0_6 = arith.constant 0 : index
    %33 = vector.load %arg4[%c0_5, %c0_6] : memref<8x128xf32, #tpu.memory_space<vmem>>, vector<8x128xf32>
    tpu.vector_store %arg4[%c0_5, %c0_6], %32 {strides = array<i32>} : memref<8x128xf32, #tpu.memory_space<vmem>>, vector<8x128xf32>,
    return
  }
  func.func @transform_0(%arg0: i32) -> (i32, i32) {
    %c0_i32 = arith.constant 0 : i32
    %c0_i32_0 = arith.constant 0 : i32
    return %arg0, %c0_i32 : i32, i32
  }
  func.func @transform_1(%arg0: i32) -> (i32, i32) {
    %c0_i32 = arith.constant 0 : i32
    %c0_i32_0 = arith.constant 0 : i32
    %c0_i32_1 = arith.constant 0 : i32
    return %c0_i32, %c0_i32_0 : i32, i32
  }
  func.func @transform_2(%arg0: i32) -> (i32, i32) {
    %c0_i32 = arith.constant 0 : i32
    %c0_i32_0 = arith.constant 0 : i32
    %c0_i32_1 = arith.constant 0 : i32
    return %c0_i32, %c0_i32_0 : i32, i32
  }
  func.func @transform_3(%arg0: i32) -> (i32, i32) {
    %c0_i32 = arith.constant 0 : i32
    %c0_i32_0 = arith.constant 0 : i32
    return %arg0, %c0_i32 : i32, i32
  }
}

</mosaic_0001>

<llo_original>
// kernel: tpu_custom_call.1
$region0: #{tpu_custom_call.1}
  #allocation0 [shape = 'u32[]', space=smem, size = 0x4, offset = 0x4, fixed_abs, tag = 'smem constant byte address 0x4 - core index']
  #allocation1 [shape = 'u32[72,128]{1,0:T(1,128)}', space=vmem, size = 0x9000, scoped, tag = 'internal scratch']
  %s0 = inlined_call_operand.vmem [shape: f32[8,4], index: 0, kind: input, shape index: {}]
  %s1 = inlined_call_operand.vmem [shape: f32[4,128], index: 1, kind: input, shape index: {}]
  %s2 = inlined_call_operand.vmem [shape: f32[1,128], index: 2, kind: input, shape index: {}]
  %s3 = inlined_call_operand.hbm [shape: f32[8,128], index: 3, kind: output, shape index: {}]
  %s4 = sld [smem:[#allocation0]]
  $region22: #{tpu_custom_call.1} parent=0
    _
  %s6 = ssub.s32 1, %s4
  %s7 = scalar_select 0, %s6, %s4
  $region1: #{tpu_custom_call.1} parent=0
    #allocation2 [shape = 'u8[4096]{0}', space=vmem, size = 0x1000, scoped, tag = 'output window, operand 0, single buffered']
    #allocation3 [shape = 's32[1]{0}', space=sflag, size = 0x4, scoped, tag = 'scoped memory for tpu_custom_call.1']
    %8 = vsyncpa [#allocation3], 0
    // Predicated region
    $region2: #{tpu_custom_call.1} parent=1 // pred_check
      _
    $region3: #{tpu_custom_call.1} parent=1 // pred_check_branch
      %10 = sbr.rel (0) target = $region5
    $region4: #{tpu_custom_call.1} parent=1 // pred_region
      _
    $region5: #{tpu_custom_call.1} parent=1 // pred_fallthru
      _
    // Predicated region
    $region6: #{tpu_custom_call.1} parent=1 // pred_check
      _
    $region7: #{tpu_custom_call.1} parent=1 // pred_check_branch
      %12 = sbr.rel (0) target = $region9
    $region8: #{tpu_custom_call.1} parent=1 // pred_region
      _
    $region9: #{tpu_custom_call.1} parent=1 // pred_fallthru
      _
    // Predicated region
    $region10: #{tpu_custom_call.1} parent=1 // pred_check
      _
    $region11: #{tpu_custom_call.1} parent=1 // pred_check_branch
      %14 = sbr.rel (0) target = $region13
    $region12: #{tpu_custom_call.1} parent=1 // pred_region
      _
    $region13: #{tpu_custom_call.1} parent=1 // pred_fallthru
      _
    %v15 = vld [vmem:[%s0] sm:$0xff]
    %v16 = vld [vmem:[%s1] sm:$0xf]
    %18 = vset.pattern.permute.xlu0 0
    %19 = vperm.xlu0 %18, %v15
    %v20 = vpop.permute.xlu0 %19
    %v22 = vperm.slane %v16, 0
    %v23 = vmul.f32 %v20, %v22
    %24 = vset.pattern.permute.xlu0 1
    %25 = vperm.xlu0 %24, %v15
    %v26 = vpop.permute.xlu0 %25
    %v28 = vperm.slane %v16, 1
    %v29 = vmul.f32 %v26, %v28
    %v30 = vadd.f32 %v23, %v29
    %31 = vset.pattern.permute.xlu0 2
    %32 = vperm.xlu0 %31, %v15
    %v33 = vpop.permute.xlu0 %32
    %v35 = vperm.slane %v16, 2
    %v36 = vmul.f32 %v33, %v35
    %v37 = vadd.f32 %v30, %v36
    %38 = vset.pattern.permute.xlu0 3
    %39 = vperm.xlu0 %38, %v15
    %v40 = vpop.permute.xlu0 %39
    %v42 = vperm.slane %v16, 3
    %v43 = vmul.f32 %v40, %v42
    %v44 = vadd.f32 %v37, %v43
    %v45 = vand.u32 2147483647, %v44
    %vm46 = vcmp.le.f32.partialorder %v45, 0.7853982
    %vm47 = vcmp.lt.s32.totalorder %v44, 0
    %v48 = vand.u32 %v44, 2139095040
    %v49 = vshrl.u32 %v48, 23
    %v50 = vsub.s32 %v49, 127
    %v51 = vand.u32 2147483647, %v44
    %v52 = vand.u32 %v51, 8388607
    %v53 = vor.u32 %v52, 8388608
    %v54 = vsub.s32 0, %v53
    %v55 = vadd.s32 %v50, 1
    %vm56 = vcmp.gt.s32.totalorder %v55, 0
    %v57 = vsel %vm56, %v55, 0
    %v58 = vshrl.u32 %v57, 5
    %v59 = vand.u32 %v57, 31
    %v60 = vsub.s32 32, %v59
    %v61 = vshrl.u32 683565275, %v60
    %v62 = vshll.u32 683565275, %v59
    %v63 = vshrl.u32 2475754826, %v60
    %v64 = vor.u32 %v62, %v63
    %v65 = vshll.u32 2475754826, %v59
    %v66 = vshrl.u32 2131351028, %v60
    %v67 = vor.u32 %v65, %v66
    %v68 = vshll.u32 2131351028, %v59
    %v69 = vshrl.u32 2102212464, %v60
    %v70 = vor.u32 %v68, %v69
    %v71 = vshll.u32 2102212464, %v59
    %v72 = vshrl.u32 920167782, %v60
    %v73 = vor.u32 %v71, %v72
    %v74 = vshll.u32 920167782, %v59
    %v75 = vshrl.u32 1326507024, %v60
    %v76 = vor.u32 %v74, %v75
    %vm77 = vcmp.lt.s32.totalorder %v58, 1
    %vm78 = vcmp.lt.s32.totalorder %v58, 2
    %vm79 = vcmp.lt.s32.totalorder %v58, 3
    %vm80 = vcmp.lt.s32.totalorder %v58, 4
    %v81 = vsel %vm77, %v61, %v64
    %v82 = vsel %vm80, %v70, 2102212464
    %v83 = vsel %vm79, %v67, %v82
    %v84 = vsel %vm78, %v81, %v83
    %v85 = vsel %vm77, %v64, %v67
    %v86 = vsel %vm80, %v73, 920167782
    %v87 = vsel %vm79, %v70, %v86
    %v88 = vsel %vm78, %v85, %v87
    %v89 = vsel %vm77, %v67, %v70
    %v90 = vsel %vm80, %v76, 1326507024
    %v91 = vsel %vm79, %v73, %v90
    %v92 = vsel %vm78, %v89, %v91
    %v93 = vshll.u32 %v53, 8
    %v94 = vand.u32 %v93, 65535
    %v95 = vshrl.u32 %v93, 16
    %v96 = vand.u32 %v92, 65535
    %v97 = vshrl.u32 %v92, 16
    %v98 = vmul.u32 %v94, %v96
    %v99 = vmul.u32 %v94, %v97
    %v100 = vmul.u32 %v95, %v96
    %v101 = vmul.u32 %v95, %v97
    %v102 = vshll.u32 %v99, 16
    %v103 = vshrl.u32 %v99, 16
    %v104 = vshll.u32 %v100, 16
    %v105 = vshrl.u32 %v100, 16
    %vm106 = vc.u32 %v98, %v102
    %v107 = vsel %vm106, 1, 0
    %v108 = vadd.s32 %v98, %v102
    %v109 = vadd.s32 %v101, %v107
    %vm110 = vc.u32 %v108, %v104
    %v111 = vsel %vm110, 1, 0
    %v112 = vadd.s32 %v108, %v104
    %v113 = vadd.s32 %v109, %v111
    %v114 = vadd.s32 %v113, %v103
    %v115 = vadd.s32 %v114, %v105
    %v116 = vand.u32 %v93, 65535
    %v117 = vshrl.u32 %v93, 16
    %v118 = vand.u32 %v88, 65535
    %v119 = vshrl.u32 %v88, 16
    %v120 = vmul.u32 %v116, %v118
    %v121 = vmul.u32 %v116, %v119
    %v122 = vmul.u32 %v117, %v118
    %v123 = vmul.u32 %v117, %v119
    %v124 = vshll.u32 %v121, 16
    %v125 = vshrl.u32 %v121, 16
    %v126 = vshll.u32 %v122, 16
    %v127 = vshrl.u32 %v122, 16
    %vm128 = vc.u32 %v120, %v124
    %v129 = vsel %vm128, 1, 0
    %v130 = vadd.s32 %v120, %v124
    %v131 = vadd.s32 %v123, %v129
    %vm132 = vc.u32 %v130, %v126
    %v133 = vsel %vm132, 1, 0
    %v134 = vadd.s32 %v130, %v126
    %v135 = vadd.s32 %v131, %v133
    %v136 = vadd.s32 %v135, %v125
    %v137 = vadd.s32 %v136, %v127
    %v138 = vmul.u32 %v93, %v84
    %v139 = vadd.s32 %v115, %v134
    %vm140 = vc.u32 %v115, %v134
    %v141 = vadd.s32 %v137, 1
    %v142 = vsel %vm140, %v141, %v137
    %v143 = vadd.s32 %v138, %v142
    %v144 = vadd.s32 %v143, 536870912
    %v145 = vshrl.u32 %v144, 30
    %v146 = vshll.u32 %v145, 30
    %v147 = vsub.s32 %v143, %v146
    %vm148 = vcmp.lt.s32.totalorder %v147, 0
    %v149 = vsub.s32 0, %v147
    %v150 = vsel %vm148, %v149, %v147
    %v151 = vclz %v150
    %v152 = vsub.s32 %v151, 2
    %vm153 = vcmp.gt.s32.totalorder 0, %v152
    %v154 = vsel %vm153, 0, %v152
    %v155 = vsub.s32 32, %v154
    %v156 = vshll.u32 %v147, %v154
    %v157 = vshrl.u32 %v139, %v155
    %v158 = vor.u32 %v156, %v157
    %v159 = vsub.s32 4294967266, %v154
    %v160 = vadd.s32 %v159, 127
    %v161 = vshll.u32 %v160, 23
    %v162 = vor.u32 4788187, %v161
    %v163 = vand.u32 2147483647, %v162
    %v165 = vcvt.s32.f32 %v158
    %v166 = vmul.f32 %v165, %v163
    %v167 = vxor.u32 %v166, 2147483648
    %v168 = vsel %vm47, %v167, %v166
    %v169 = vsub.s32 4, %v145
    %v170 = vsel %vm47, %v169, %v145
    %v171 = vsel %vm46, %v44, %v168
    %v172 = vsel %vm46, 0, %v170
    %v173 = vmul.f32 %v171, %v171
    %v174 = vmul.f32 %v173, -0.001358992
    %v175 = vadd.f32 %v174, 0.041655596
    %v176 = vmul.f32 %v173, %v175
    %v177 = vadd.f32 %v176, -0.4999988
    %v178 = vmul.f32 %v173, %v177
    %v179 = vadd.f32 1.0, %v178
    %v180 = vmul.f32 %v171, %v171
    %v181 = vmul.f32 %v180, -0.00019511016
    %v182 = vadd.f32 %v181, 0.008332121
    %v183 = vmul.f32 %v180, %v182
    %v184 = vadd.f32 %v183, -0.16666654
    %v185 = vmul.f32 %v180, %v184
    %v186 = vadd.f32 %v185, 1.0
    %v187 = vmul.f32 %v186, %v171
    %vm188 = vweird.f32 %v44
    %v189 = vadd.s32 %v172, 3
    %v190 = vand.u32 %v189, 3
    %vm191 = vcmp.lt.s32.totalorder %v190, 2
    %vm192 = vcmp.eq.s32.totalorder %v190, 0
    %v193 = vxor.u32 %v187, 2147483648
    %v194 = vsel %vm192, %v179, %v193
    %vm195 = vcmp.eq.s32.totalorder %v190, 2
    %v196 = vxor.u32 %v179, 2147483648
    %v197 = vsel %vm195, %v196, %v187
    %v198 = vsel %vm191, %v194, %v197
    %v199 = vsel %vm188, nan, %v198
    %v200 = vand.u32 2147483647, %v44
    %vm201 = vcmp.le.f32.partialorder %v200, 0.7853982
    %vm202 = vcmp.lt.s32.totalorder %v44, 0
    %v203 = vand.u32 %v44, 2139095040
    %v204 = vshrl.u32 %v203, 23
    %v205 = vsub.s32 %v204, 127
    %v206 = vand.u32 2147483647, %v44
    %v207 = vand.u32 %v206, 8388607
    %v208 = vor.u32 %v207, 8388608
    %v209 = vsub.s32 0, %v208
    %v210 = vadd.s32 %v205, 1
    %vm211 = vcmp.gt.s32.totalorder %v210, 0
    %v212 = vsel %vm211, %v210, 0
    %v213 = vshrl.u32 %v212, 5
    %v214 = vand.u32 %v212, 31
    %v215 = vsub.s32 32, %v214
    %v216 = vshrl.u32 683565275, %v215
    %v217 = vshll.u32 683565275, %v214
    %v218 = vshrl.u32 2475754826, %v215
    %v219 = vor.u32 %v217, %v218
    %v220 = vshll.u32 2475754826, %v214
    %v221 = vshrl.u32 2131351028, %v215
    %v222 = vor.u32 %v220, %v221
    %v223 = vshll.u32 2131351028, %v214
    %v224 = vshrl.u32 2102212464, %v215
    %v225 = vor.u32 %v223, %v224
    %v226 = vshll.u32 2102212464, %v214
    %v227 = vshrl.u32 920167782, %v215
    %v228 = vor.u32 %v226, %v227
    %v229 = vshll.u32 920167782, %v214
    %v230 = vshrl.u32 1326507024, %v215
    %v231 = vor.u32 %v229, %v230
    %vm232 = vcmp.lt.s32.totalorder %v213, 1
    %vm233 = vcmp.lt.s32.totalorder %v213, 2
    %vm234 = vcmp.lt.s32.totalorder %v213, 3
    %vm235 = vcmp.lt.s32.totalorder %v213, 4
    %v236 = vsel %vm232, %v216, %v219
    %v237 = vsel %vm235, %v225, 2102212464
    %v238 = vsel %vm234, %v222, %v237
    %v239 = vsel %vm233, %v236, %v238
    %v240 = vsel %vm232, %v219, %v222
    %v241 = vsel %vm235, %v228, 920167782
    %v242 = vsel %vm234, %v225, %v241
    %v243 = vsel %vm233, %v240, %v242
    %v244 = vsel %vm232, %v222, %v225
    %v245 = vsel %vm235, %v231, 1326507024
    %v246 = vsel %vm234, %v228, %v245
    %v247 = vsel %vm233, %v244, %v246
    %v248 = vshll.u32 %v208, 8
    %v249 = vand.u32 %v248, 65535
    %v250 = vshrl.u32 %v248, 16
    %v251 = vand.u32 %v247, 65535
    %v252 = vshrl.u32 %v247, 16
    %v253 = vmul.u32 %v249, %v251
    %v254 = vmul.u32 %v249, %v252
    %v255 = vmul.u32 %v250, %v251
    %v256 = vmul.u32 %v250, %v252
    %v257 = vshll.u32 %v254, 16
    %v258 = vshrl.u32 %v254, 16
    %v259 = vshll.u32 %v255, 16
    %v260 = vshrl.u32 %v255, 16
    %vm261 = vc.u32 %v253, %v257
    %v262 = vsel %vm261, 1, 0
    %v263 = vadd.s32 %v253, %v257
    %v264 = vadd.s32 %v256, %v262
    %vm265 = vc.u32 %v263, %v259
    %v266 = vsel %vm265, 1, 0
    %v267 = vadd.s32 %v263, %v259
    %v268 = vadd.s32 %v264, %v266
    %v269 = vadd.s32 %v268, %v258
    %v270 = vadd.s32 %v269, %v260
    %v271 = vand.u32 %v248, 65535
    %v272 = vshrl.u32 %v248, 16
    %v273 = vand.u32 %v243, 65535
    %v274 = vshrl.u32 %v243, 16
    %v275 = vmul.u32 %v271, %v273
    %v276 = vmul.u32 %v271, %v274
    %v277 = vmul.u32 %v272, %v273
    %v278 = vmul.u32 %v272, %v274
    %v279 = vshll.u32 %v276, 16
    %v280 = vshrl.u32 %v276, 16
    %v281 = vshll.u32 %v277, 16
    %v282 = vshrl.u32 %v277, 16
    %vm283 = vc.u32 %v275, %v279
    %v284 = vsel %vm283, 1, 0
    %v285 = vadd.s32 %v275, %v279
    %v286 = vadd.s32 %v278, %v284
    %vm287 = vc.u32 %v285, %v281
    %v288 = vsel %vm287, 1, 0
    %v289 = vadd.s32 %v285, %v281
    %v290 = vadd.s32 %v286, %v288
    %v291 = vadd.s32 %v290, %v280
    %v292 = vadd.s32 %v291, %v282
    %v293 = vmul.u32 %v248, %v239
    %v294 = vadd.s32 %v270, %v289
    %vm295 = vc.u32 %v270, %v289
    %v296 = vadd.s32 %v292, 1
    %v297 = vsel %vm295, %v296, %v292
    %v298 = vadd.s32 %v293, %v297
    %v299 = vadd.s32 %v298, 536870912
    %v300 = vshrl.u32 %v299, 30
    %v301 = vshll.u32 %v300, 30
    %v302 = vsub.s32 %v298, %v301
    %vm303 = vcmp.lt.s32.totalorder %v302, 0
    %v304 = vsub.s32 0, %v302
    %v305 = vsel %vm303, %v304, %v302
    %v306 = vclz %v305
    %v307 = vsub.s32 %v306, 2
    %vm308 = vcmp.gt.s32.totalorder 0, %v307
    %v309 = vsel %vm308, 0, %v307
    %v310 = vsub.s32 32, %v309
    %v311 = vshll.u32 %v302, %v309
    %v312 = vshrl.u32 %v294, %v310
    %v313 = vor.u32 %v311, %v312
    %v314 = vsub.s32 4294967266, %v309
    %v315 = vadd.s32 %v314, 127
    %v316 = vshll.u32 %v315, 23
    %v317 = vor.u32 4788187, %v316
    %v318 = vand.u32 2147483647, %v317
    %v320 = vcvt.s32.f32 %v313
    %v321 = vmul.f32 %v320, %v318
    %v322 = vxor.u32 %v321, 2147483648
    %v323 = vsel %vm202, %v322, %v321
    %v324 = vsub.s32 4, %v300
    %v325 = vsel %vm202, %v324, %v300
    %v326 = vsel %vm201, %v44, %v323
    %v327 = vsel %vm201, 0, %v325
    %v328 = vmul.f32 %v326, %v326
    %v329 = vmul.f32 %v328, -0.001358992
    %v330 = vadd.f32 %v329, 0.041655596
    %v331 = vmul.f32 %v328, %v330
    %v332 = vadd.f32 %v331, -0.4999988
    %v333 = vmul.f32 %v328, %v332
    %v334 = vadd.f32 1.0, %v333
    %v335 = vmul.f32 %v326, %v326
    %v336 = vmul.f32 %v335, -0.00019511016
    %v337 = vadd.f32 %v336, 0.008332121
    %v338 = vmul.f32 %v335, %v337
    %v339 = vadd.f32 %v338, -0.16666654
    %v340 = vmul.f32 %v335, %v339
    %v341 = vadd.f32 %v340, 1.0
    %v342 = vmul.f32 %v341, %v326
    %vm343 = vweird.f32 %v44
    %v344 = vand.u32 %v327, 3
    %vm345 = vcmp.lt.s32.totalorder %v344, 2
    %vm346 = vcmp.eq.s32.totalorder %v344, 0
    %v347 = vxor.u32 %v342, 2147483648
    %v348 = vsel %vm346, %v334, %v347
    %vm349 = vcmp.eq.s32.totalorder %v344, 2
    %v350 = vxor.u32 %v334, 2147483648
    %v351 = vsel %vm349, %v350, %v342
    %v352 = vsel %vm345, %v348, %v351
    %v353 = vsel %vm343, nan, %v352
    %v354 = vld [vmem:[%s2] sm:$0x1]
    %vm355 = vcmp.gt.f32.partialorder %v354, 0.5
    %v356 = vsel %vm355, 1, 0
    %v357 = vperm.slane %v356, 0
    %vm358 = vcmp.eq.s32.totalorder %v357, 1
    %v359 = vsel %vm358, %v199, %v353
    %360 = vst [vmem:[#allocation2] sm:$0xff] %v359
    // Predicated region
    $region14: #{tpu_custom_call.1} parent=1 // pred_check
      _
    $region15: #{tpu_custom_call.1} parent=1 // pred_check_branch
      %362 = sbr.rel (0) target = $region17
    $region16: #{tpu_custom_call.1} parent=1 // pred_region
      %364 = vsyncadd [#allocation3], 0
      %s366 = sshll.u32 [#allocation2], 4
      %s367 = int_to_ptr.vmem [resolvable:$true] %s366
      %s368 = sshll.u32 %s3, 4
      %s369 = int_to_ptr.hbm [resolvable:$true] %s368
      %371 = dma.vmem_to_hbm [thread:$0]  %s367, 128, %s369, [#allocation3]
    $region17: #{tpu_custom_call.1} parent=1 // pred_fallthru
      _
    // Predicated region
    $region18: #{tpu_custom_call.1} parent=1 // pred_check
      _
    $region19: #{tpu_custom_call.1} parent=1 // pred_check_branch
      %373 = sbr.rel (0) target = $region21
    $region20: #{tpu_custom_call.1} parent=1 // pred_region
      %375 = dma.done [#allocation3], 128
    $region21: #{tpu_custom_call.1} parent=1 // pred_fallthru
      _
    %376 = vsyncpa [#allocation3], 1

</llo_original>
